<compile_context>
chip_gen: v5e
topology: v5e:2x2
jax: 0.10.0
libtpu: 0.0.40
codegen_flags: <defaults>
</compile_context>

<pallas_src>
import jax
import jax.numpy as jnp
from jax.experimental import pallas as pl
from jax.experimental.pallas import tpu as pltpu


def _diag_bias_kernel(x_ref, seg_ref, b_ref, o_ref):
    # x_ref: (tb, input_dim), seg_ref: (input_dim, output_dim), b_ref: (1, output_dim)
    acc = jnp.dot(x_ref[...], seg_ref[...], preferred_element_type=jnp.float32)
    o_ref[...] = (acc + b_ref[...]).astype(o_ref.dtype)


def _diag_nobias_kernel(x_ref, seg_ref, o_ref):
    o_ref[...] = jnp.dot(
        x_ref[...], seg_ref[...], preferred_element_type=jnp.float32
    ).astype(o_ref.dtype)


def _pick_batch_tile(B, input_dim, itemsize):
    """Largest batch tile that comfortably fits the smallest default scoped VMEM."""
    if B <= 8:
        return B  # block dim == full array dim is always legal
    budget = 12 * 1024 * 1024  # conservative: v5e 16 MiB default scoped VMEM
    cap = max(8, (budget // (2 * input_dim * itemsize)) // 8 * 8)  # double-buffered x
    b_pad = -(-B // 8) * 8
    # Prefer big tiles (>= 512 rows where the batch allows) to amortize per-step
    # overhead; cap at 1024 rows to keep per-step VMEM modest for wide inputs.
    return int(min(b_pad, cap, 1024))


def diagonal_forward(x, kernel, bias, output_dim, *, tb=None):
    """x: (B, input_dim); kernel: (1, input_dim); bias: (output_dim,) or None."""
    B, input_dim = x.shape
    assert input_dim % output_dim == 0
    n = input_dim // output_dim

    # Segment matrix: seg[i, o] = kernel[0, i] if i // n == o else 0.
    # Built once per call in the wrapper (tiny), kept VMEM-resident in the kernel.
    rows = jax.lax.broadcasted_iota(jnp.int32, (input_dim, output_dim), 0) // n
    cols = jax.lax.broadcasted_iota(jnp.int32, (input_dim, output_dim), 1)
    seg = jnp.where(rows == cols, kernel.reshape(input_dim, 1), 0.0).astype(x.dtype)

    if tb is None:
        tb = _pick_batch_tile(B, input_dim, x.dtype.itemsize)
    grid = (pl.cdiv(B, tb),)

    x_spec = pl.BlockSpec((tb, input_dim), lambda i: (i, 0))
    seg_spec = pl.BlockSpec((input_dim, output_dim), lambda i: (0, 0))  # resident
    out_spec = pl.BlockSpec((tb, output_dim), lambda i: (i, 0))
    out_shape = jax.ShapeDtypeStruct((B, output_dim), x.dtype)

    itemsize = x.dtype.itemsize
    bytes_accessed = (x.size + seg.size) * itemsize + B * output_dim * itemsize
    flops = 2 * B * input_dim * output_dim  # actual MXU work (incl. structural zeros)

    compiler_params = pltpu.CompilerParams(dimension_semantics=("parallel",))

    if bias is None:
        return pl.pallas_call(
            _diag_nobias_kernel,
            grid=grid,
            in_specs=[x_spec, seg_spec],
            out_specs=out_spec,
            out_shape=out_shape,
            compiler_params=compiler_params,
            cost_estimate=pl.CostEstimate(
                flops=flops, transcendentals=0, bytes_accessed=bytes_accessed
            ),
        )(x, seg)

    bias2d = bias.reshape(1, output_dim).astype(jnp.float32)
    b_spec = pl.BlockSpec((1, output_dim), lambda i: (0, 0))
    return pl.pallas_call(
        _diag_bias_kernel,
        grid=grid,
        in_specs=[x_spec, seg_spec, b_spec],
        out_specs=out_spec,
        out_shape=out_shape,
        compiler_params=compiler_params,
        cost_estimate=pl.CostEstimate(
            flops=flops + B * output_dim,
            transcendentals=0,
            bytes_accessed=bytes_accessed + bias2d.size * 4,
        ),
    )(x, seg, bias2d)


if __name__ == "__main__":
    key = jax.random.PRNGKey(0)
    k_x, k_w, k_b, k_x2 = jax.random.split(key, 4)

    input_dim, output_dim = 128, 16  # n_inputs_per_node = 8

    # Use bf16-representable test data so the correctness check is independent
    # of the MXU's f32 decomposition policy (products are then exact in f32).
    def bf16_round(v):
        return v.astype(jnp.bfloat16).astype(jnp.float32)

    x = bf16_round(jax.random.normal(k_x, (8, input_dim), dtype=jnp.float32))

    # Xavier/Glorot uniform init of the (1, input_dim) kernel parameter.
    limit = (6.0 / (1 + input_dim)) ** 0.5
    kernel = bf16_round(
        jax.random.uniform(
            k_w, (1, input_dim), dtype=jnp.float32, minval=-limit, maxval=limit
        )
    )
    # Module initializes bias to zeros; use a non-zero bias so the bias path is
    # actually exercised by the check.
    bias = bf16_round(jax.random.normal(k_b, (output_dim,), dtype=jnp.float32))

    def ref_forward(xv, kv, bv):
        n = input_dim // output_dim
        mult = (xv * kv).reshape(-1, n).sum(axis=1).reshape(-1, output_dim)
        return mult if bv is None else mult + bv

    # Single-step grid (whole batch in one tile).
    out_b = jax.block_until_ready(diagonal_forward(x, kernel, bias, output_dim))
    out_nb = jax.block_until_ready(diagonal_forward(x, kernel, None, output_dim))
    assert out_b.shape == (8, output_dim)
    assert out_nb.shape == (8, output_dim)
    assert jnp.allclose(out_b, ref_forward(x, kernel, bias), atol=1e-5, rtol=1e-5)
    assert jnp.allclose(out_nb, ref_forward(x, kernel, None), atol=1e-5, rtol=1e-5)

    # Multi-step batch grid (exercises the resident segment matrix across steps).
    x_big = bf16_round(jax.random.normal(k_x2, (48, input_dim), dtype=jnp.float32))
    out_big = jax.block_until_ready(
        diagonal_forward(x_big, kernel, bias, output_dim, tb=16)
    )
    assert out_big.shape == (48, output_dim)
    assert jnp.allclose(
        out_big, ref_forward(x_big, kernel, bias), atol=1e-5, rtol=1e-5
    )

    print("KERNEL_OK")
</pallas_src>

<mosaic_0001>
module attributes {stable_mosaic.version = 11 : i64} {
  func.func @_diag_bias_kernel(%arg0: i32, %arg1: memref<8x128xf32, #tpu.memory_space<vmem>>, %arg2: memref<128x16xf32, #tpu.memory_space<vmem>>, %arg3: memref<1x16xf32, #tpu.memory_space<vmem>>, %arg4: memref<8x16xf32, #tpu.memory_space<vmem>>) attributes {dimension_semantics = [#tpu.dimension_semantics<parallel>], iteration_bounds = array<i64: 1>, scalar_prefetch = 0 : i64, scratch_operands = 0 : i64, tpu.core_type = #tpu.core_type<tc>, window_params = [{transform_indices = @transform_0, window_bounds = array<i64: 8, 128>}, {pipeline_mode = #tpu.pipeline_mode<synchronous>, transform_indices = @transform_1, window_bounds = array<i64: 128, 16>}, {pipeline_mode = #tpu.pipeline_mode<synchronous>, transform_indices = @transform_2, window_bounds = array<i64: 1, 16>}, {transform_indices = @transform_3, window_bounds = array<i64: 8, 16>}]} {
    %c0 = arith.constant 0 : index
    %c0_0 = arith.constant 0 : index
    %0 = vector.load %arg1[%c0, %c0_0] : memref<8x128xf32, #tpu.memory_space<vmem>>, vector<8x128xf32>
    %c0_1 = arith.constant 0 : index
    %c0_2 = arith.constant 0 : index
    %1 = vector.load %arg2[%c0_1, %c0_2] : memref<128x16xf32, #tpu.memory_space<vmem>>, vector<128x16xf32>
    %cst = arith.constant dense<0.000000e+00> : vector<8x16xf32>
    %2 = tpu.matmul %0, %1, %cst {dimension_numbers = #tpu.dot_dimension_numbers<[1], [0], [0], [1], [0, 0, 1, 1], [], []>} : vector<8x128xf32>, vector<128x16xf32>, vector<8x16xf32> -> vector<8x16xf32>
    %c0_3 = arith.constant 0 : index
    %c0_4 = arith.constant 0 : index
    %3 = vector.load %arg3[%c0_3, %c0_4] : memref<1x16xf32, #tpu.memory_space<vmem>>, vector<1x16xf32>
    %4 = vector.broadcast %3 : vector<1x16xf32> to vector<8x16xf32>
    %5 = arith.addf %2, %4 : vector<8x16xf32>
    %c0_5 = arith.constant 0 : index
    %c0_6 = arith.constant 0 : index
    %6 = vector.load %arg4[%c0_5, %c0_6] : memref<8x16xf32, #tpu.memory_space<vmem>>, vector<8x16xf32>
    tpu.vector_store %arg4[%c0_5, %c0_6], %5 {strides = array<i32>} : memref<8x16xf32, #tpu.memory_space<vmem>>, vector<8x16xf32>,
    return
  }
  func.func @transform_0(%arg0: i32) -> (i32, i32) {
    %c0_i32 = arith.constant 0 : i32
    %c0_i32_0 = arith.constant 0 : i32
    return %arg0, %c0_i32 : i32, i32
  }
  func.func @transform_1(%arg0: i32) -> (i32, i32) {
    %c0_i32 = arith.constant 0 : i32
    %c0_i32_0 = arith.constant 0 : i32
    %c0_i32_1 = arith.constant 0 : i32
    return %c0_i32, %c0_i32_0 : i32, i32
  }
  func.func @transform_2(%arg0: i32) -> (i32, i32) {
    %c0_i32 = arith.constant 0 : i32
    %c0_i32_0 = arith.constant 0 : i32
    %c0_i32_1 = arith.constant 0 : i32
    return %c0_i32, %c0_i32_0 : i32, i32
  }
  func.func @transform_3(%arg0: i32) -> (i32, i32) {
    %c0_i32 = arith.constant 0 : i32
    %c0_i32_0 = arith.constant 0 : i32
    return %arg0, %c0_i32 : i32, i32
  }
}

</mosaic_0001>

<llo_original>
// kernel: tpu_custom_call.1
$region0: #{tpu_custom_call.1}
  #allocation0 [shape = 'u32[]', space=smem, size = 0x4, offset = 0x4, fixed_abs, tag = 'smem constant byte address 0x4 - core index']
  #allocation1 [shape = 'u32[72,128]{1,0:T(1,128)}', space=vmem, size = 0x9000, scoped, tag = 'internal scratch']
  %s0 = inlined_call_operand.vmem [shape: f32[8,128], index: 0, kind: input, shape index: {}]
  %s1 = inlined_call_operand.vmem [shape: f32[128,16], index: 1, kind: input, shape index: {}]
  %s2 = inlined_call_operand.vmem [shape: f32[1,16], index: 2, kind: input, shape index: {}]
  %s3 = inlined_call_operand.hbm [shape: f32[8,16], index: 3, kind: output, shape index: {}]
  %s4 = sld [smem:[#allocation0]]
  $region22: #{tpu_custom_call.1} parent=0
    _
  %s6 = ssub.s32 1, %s4
  %s7 = scalar_select 0, %s6, %s4
  $region1: #{tpu_custom_call.1} parent=0
    #allocation2 [shape = 'u8[4096]{0}', space=vmem, size = 0x1000, scoped, tag = 'output window, operand 0, single buffered']
    #allocation3 [shape = 's32[1]{0}', space=sflag, size = 0x4, scoped, tag = 'scoped memory for tpu_custom_call.1']
    %8 = vsyncpa [#allocation3], 0
    // Predicated region
    $region2: #{tpu_custom_call.1} parent=1 // pred_check
      _
    $region3: #{tpu_custom_call.1} parent=1 // pred_check_branch
      %10 = sbr.rel (0) target = $region5
    $region4: #{tpu_custom_call.1} parent=1 // pred_region
      _
    $region5: #{tpu_custom_call.1} parent=1 // pred_fallthru
      _
    // Predicated region
    $region6: #{tpu_custom_call.1} parent=1 // pred_check
      _
    $region7: #{tpu_custom_call.1} parent=1 // pred_check_branch
      %12 = sbr.rel (0) target = $region9
    $region8: #{tpu_custom_call.1} parent=1 // pred_region
      _
    $region9: #{tpu_custom_call.1} parent=1 // pred_fallthru
      _
    // Predicated region
    $region10: #{tpu_custom_call.1} parent=1 // pred_check
      _
    $region11: #{tpu_custom_call.1} parent=1 // pred_check_branch
      %14 = sbr.rel (0) target = $region13
    $region12: #{tpu_custom_call.1} parent=1 // pred_region
      _
    $region13: #{tpu_custom_call.1} parent=1 // pred_fallthru
      _
    %v15 = vld [vmem:[%s0] sm:$0xff]
    %v16 = vld [vmem:[%s1] sm:$0xff]
    %v17 = vld [vmem:[%s1 + $0x8] sm:$0xff]
    %v18 = vld [vmem:[%s1 + $0x10] sm:$0xff]
    %v19 = vld [vmem:[%s1 + $0x18] sm:$0xff]
    %v20 = vld [vmem:[%s1 + $0x20] sm:$0xff]
    %v21 = vld [vmem:[%s1 + $0x28] sm:$0xff]
    %v22 = vld [vmem:[%s1 + $0x30] sm:$0xff]
    %v23 = vld [vmem:[%s1 + $0x38] sm:$0xff]
    %v24 = vld [vmem:[%s1 + $0x40] sm:$0xff]
    %v25 = vld [vmem:[%s1 + $0x48] sm:$0xff]
    %v26 = vld [vmem:[%s1 + $0x50] sm:$0xff]
    %v27 = vld [vmem:[%s1 + $0x58] sm:$0xff]
    %v28 = vld [vmem:[%s1 + $0x60] sm:$0xff]
    %v29 = vld [vmem:[%s1 + $0x68] sm:$0xff]
    %v30 = vld [vmem:[%s1 + $0x70] sm:$0xff]
    %v31 = vld [vmem:[%s1 + $0x78] sm:$0xff]
    %v32 = vld [vmem:[%s2] sm:$0x1]
    %v34 = vperm.slane %v32, 0
    %36 = vmatpush.msra.mxu0 %v31
    %37 = vmatpush.msra.mxu0 %v30
    %38 = vmatpush.msra.mxu0 %v29
    %39 = vmatpush.msra.mxu0 %v28
    %40 = vmatpush.msra.mxu0 %v27
    %41 = vmatpush.msra.mxu0 %v26
    %42 = vmatpush.msra.mxu0 %v25
    %43 = vmatpush.msra.mxu0 %v24
    %44 = vmatpush.msra.mxu0 %v23
    %45 = vmatpush.msra.mxu0 %v22
    %46 = vmatpush.msra.mxu0 %v21
    %47 = vmatpush.msra.mxu0 %v20
    %48 = vmatpush.msra.mxu0 %v19
    %49 = vmatpush.msra.mxu0 %v18
    %50 = vmatpush.msra.mxu0 %v17
    %51 = vmatpush.msra.mxu0 %v16
    %52 = vmatmul.f32.gmra.mxu0 %v15
    %v53 = vpop.f32.mrf.mxu0
    %v54 = vadd.f32 %v34, %v53
    %55 = vdwg.mxu0
    %vm56 = vcmask 130048
    %57 = vst.msk [vmem:[#allocation2] sm:$0xff] %vm56, %v54
    // Predicated region
    $region14: #{tpu_custom_call.1} parent=1 // pred_check
      _
    $region15: #{tpu_custom_call.1} parent=1 // pred_check_branch
      %59 = sbr.rel (0) target = $region17
    $region16: #{tpu_custom_call.1} parent=1 // pred_region
      %61 = vsyncadd [#allocation3], 0
      %s63 = sshll.u32 [#allocation2], 4
      %s64 = int_to_ptr.vmem [resolvable:$true] %s63
      %s65 = sshll.u32 %s3, 4
      %s66 = int_to_ptr.hbm [resolvable:$true] %s65
      %68 = dma.vmem_to_hbm [thread:$0]  %s64, 128, %s66, [#allocation3]
    $region17: #{tpu_custom_call.1} parent=1 // pred_fallthru
      _
    // Predicated region
    $region18: #{tpu_custom_call.1} parent=1 // pred_check
      _
    $region19: #{tpu_custom_call.1} parent=1 // pred_check_branch
      %70 = sbr.rel (0) target = $region21
    $region20: #{tpu_custom_call.1} parent=1 // pred_region
      %72 = dma.done [#allocation3], 128
    $region21: #{tpu_custom_call.1} parent=1 // pred_fallthru
      _
    %73 = vsyncpa [#allocation3], 1

</llo_original>
